<compile_context>
chip_gen: v7x
topology: tpu7x:2x2x1
jax: 0.10.0
libtpu: 0.0.40
codegen_flags: <defaults>
</compile_context>

<pallas_src>
import functools

import numpy as np
import jax
import jax.numpy as jnp
from jax import lax
from jax.experimental import pallas as pl
from jax.experimental.pallas import tpu as pltpu


# ---------------------------------------------------------------------------
# Kernels.  Weight is kept in PyTorch (out_dim, in_dim) layout; the contraction
# is over the LAST dim of both operands, so no transpose is needed anywhere.
# ---------------------------------------------------------------------------
_DN = (((1,), (1,)), ((), ()))   # contract x dim 1 with w dim 1 -> (tm, tn)


def _linear_relu_single_k(x_ref, w_ref, b_ref, o_ref):
    """Full K reduction in one step.  x:(tm,K) w:(tn,K) b:(1,tn) o:(tm,tn)."""
    acc = lax.dot_general(x_ref[...], w_ref[...], _DN,
                          preferred_element_type=jnp.float32)
    o_ref[...] = jnp.maximum(acc + b_ref[...], 0.0).astype(o_ref.dtype)


def _linear_relu_multi_k_f32out(x_ref, w_ref, b_ref, o_ref):
    """K-tiled reduction, f32 output: accumulate directly into o_ref.

    INVARIANT: this is only valid because K is the LAST grid axis and the
    output index_map ignores it (the o_ref block stays resident across the
    whole K sweep).  Do not reorder the grid without revisiting this.
    """
    k = pl.program_id(2)

    @pl.when(k == 0)
    def _():
        o_ref[...] = jnp.broadcast_to(b_ref[...], o_ref.shape)

    o_ref[...] += lax.dot_general(x_ref[...], w_ref[...], _DN,
                                  preferred_element_type=jnp.float32)

    @pl.when(k == pl.num_programs(2) - 1)
    def _():
        o_ref[...] = jnp.maximum(o_ref[...], 0.0)


def _linear_relu_multi_k_scratch(x_ref, w_ref, b_ref, o_ref, acc_ref):
    """K-tiled reduction, non-f32 output: f32 VMEM accumulator scratch."""
    k = pl.program_id(2)

    @pl.when(k == 0)
    def _():
        acc_ref[...] = jnp.broadcast_to(b_ref[...], acc_ref.shape)

    acc_ref[...] += lax.dot_general(x_ref[...], w_ref[...], _DN,
                                    preferred_element_type=jnp.float32)

    @pl.when(k == pl.num_programs(2) - 1)
    def _():
        o_ref[...] = jnp.maximum(acc_ref[...], 0.0).astype(o_ref.dtype)


# ---------------------------------------------------------------------------
# Static (trace-time) tiling helpers
# ---------------------------------------------------------------------------
def _round_up(x: int, m: int) -> int:
    return ((x + m - 1) // m) * m


def _divisor_tiles(padded: int, cap=None, align: int = 128):
    """Descending multiples of `align` dividing `padded` (itself a multiple of
    `align`), optionally capped.  Guarantees at least one candidate."""
    cands = [t for t in range(padded, 0, -align) if padded % t == 0]
    if cap is not None:
        cands = [t for t in cands if t <= cap] or [align]
    return cands


def _vmem_capacity_bytes() -> int:
    try:
        return int(pltpu.get_tpu_info().vmem_capacity_bytes)
    except Exception:
        return 64 * 1024 * 1024   # conservative (v7x has 64 MiB per TensorCore)


def _plan_tiles(M, in_dim, out_dim, in_bytes, out_bytes,
                tm_max, tn_cap, tk_cap, vmem_budget):
    """Returns (tm, m_pad, tn, n_pad, tk, k_pad, multi_k)."""
    # M tiling: align to the operand dtype's sublane packing; full 256-row MXU
    # passes when M is large.
    m_align = max(8, 32 // in_bytes)          # 8 for f32, 16 for bf16
    if M <= tm_max:
        tm = _round_up(M, m_align)
        m_pad = tm
    else:
        tm = tm_max
        m_pad = _round_up(M, tm)

    k_pad = _round_up(in_dim, 128)
    n_pad = _round_up(out_dim, 128)

    def fits(tn, tk, multi_k):
        b = 2 * tm * tk * in_bytes            # x tile, double-buffered
        b += 2 * tn * tk * in_bytes           # W tile, double-buffered
        b += 2 * tn * 4                       # bias tile
        b += 2 * tm * tn * out_bytes          # output tile, double-buffered
        if multi_k and out_bytes != 4:
            b += tm * tn * 4                  # f32 accumulator scratch
        return b <= vmem_budget

    # Prefer full-K residency (kt == 1): W is then DMA'd exactly once per
    # output-column tile instead of being re-streamed for every M tile.
    if tk_cap is None or tk_cap >= k_pad:
        for tn in _divisor_tiles(n_pad, tn_cap):
            if fits(tn, k_pad, multi_k=False):
                return tm, m_pad, tn, n_pad, k_pad, k_pad, False

    # Fallback: stream K (only for very large in_dim / small VMEM budgets).
    for tn in _divisor_tiles(n_pad, tn_cap if tn_cap is not None else 512):
        for tk in _divisor_tiles(k_pad, tk_cap):
            if fits(tn, tk, multi_k=True):
                return tm, m_pad, tn, n_pad, tk, k_pad, True

    # Last resort: smallest lane-dense tiles.
    return tm, m_pad, 128, n_pad, 128, k_pad, True


# ---------------------------------------------------------------------------
# One-time weight packing (call OUTSIDE the per-step hot path)
# ---------------------------------------------------------------------------
def pack_fc7_weight(weight, compute_dtype=jnp.bfloat16):
    """Cast the (out_dim, in_dim) weight to the MXU operand dtype and zero-pad
    both dims to multiples of 128.  Layout stays PyTorch (out_dim, in_dim);
    no transpose is ever needed because the kernel contracts over the last dim
    of both operands.  Passing the packed weight to finetune_fc7_forward makes
    the per-call wrapper do zero HBM passes over W."""
    out_dim, in_dim = weight.shape
    n_pad, k_pad = _round_up(out_dim, 128), _round_up(in_dim, 128)
    w = weight if compute_dtype is None else weight.astype(compute_dtype)
    if (n_pad, k_pad) != (out_dim, in_dim):
        w = jnp.pad(w, ((0, n_pad - out_dim), (0, k_pad - in_dim)))
    return w


# ---------------------------------------------------------------------------
# Forward wrapper
# ---------------------------------------------------------------------------
@functools.partial(
    jax.jit, static_argnames=("compute_dtype", "tm_max", "tn_cap", "tk_cap"))
def finetune_fc7_forward(image, weight, bias, *, compute_dtype=jnp.bfloat16,
                         tm_max=256, tn_cap=None, tk_cap=None):
    """relu(image @ W.T + b).

    image : (..., in_dim)      activations; output keeps this dtype.
    weight: (out_dim, in_dim)  PyTorch nn.Linear layout; may be pre-packed with
                               pack_fc7_weight() (cast + 128-padded) so no
                               per-call HBM passes over W happen here.
    bias  : (out_dim,)
    compute_dtype: MXU operand dtype (default bf16); None keeps input dtypes.
    """
    in_dim = image.shape[-1]
    out_dim = bias.shape[0]
    lead = image.shape[:-1]
    out_dtype = image.dtype

    op_dtype = compute_dtype if compute_dtype is not None else image.dtype
    in_bytes = np.dtype(op_dtype).itemsize
    out_bytes = np.dtype(out_dtype).itemsize

    x = image.reshape(-1, in_dim)
    M = x.shape[0]

    vmem_cap = _vmem_capacity_bytes()
    tm, m_pad, tn, n_pad, tk, k_pad, multi_k = _plan_tiles(
        M, in_dim, out_dim, in_bytes, out_bytes,
        tm_max, tn_cap, tk_cap, vmem_budget=int(0.6 * vmem_cap))

    # --- operand preparation (all skipped when dims are aligned and the
    #     weight was pre-packed) ---
    if x.dtype != op_dtype:
        x = x.astype(op_dtype)
    if m_pad != M or k_pad != in_dim:
        x = jnp.pad(x, ((0, m_pad - M), (0, k_pad - in_dim)))

    w = weight
    if w.dtype != op_dtype:
        w = w.astype(op_dtype)
    if w.shape != (n_pad, k_pad):
        w = jnp.pad(w, ((0, n_pad - w.shape[0]), (0, k_pad - w.shape[1])))

    b = bias.astype(jnp.float32).reshape(1, -1)
    if b.shape[1] != n_pad:
        b = jnp.pad(b, ((0, 0), (0, n_pad - b.shape[1])))

    mt, nt, kt = m_pad // tm, n_pad // tn, k_pad // tk
    x_total = m_pad * k_pad * in_bytes
    w_total = n_pad * k_pad * in_bytes

    if not multi_k:
        # Choose the outer ("parallel", megacore-sharded on v7x) axis so the
        # operand that gets re-streamed / duplicated is the smaller one:
        #   M outer -> W re-streamed (mt-1) extra times
        #   N outer -> x re-streamed (nt-1) extra times
        m_outer = (mt - 1) * w_total <= (nt - 1) * x_total
        if m_outer:
            grid = (mt, nt)
            in_specs = [
                pl.BlockSpec((tm, tk), lambda i, j: (i, 0)),   # x tile
                pl.BlockSpec((tn, tk), lambda i, j: (j, 0)),   # W panel
                pl.BlockSpec((1, tn), lambda i, j: (0, j)),    # bias tile
            ]
            out_specs = pl.BlockSpec((tm, tn), lambda i, j: (i, j))
        else:
            grid = (nt, mt)
            in_specs = [
                pl.BlockSpec((tm, tk), lambda j, i: (i, 0)),
                pl.BlockSpec((tn, tk), lambda j, i: (j, 0)),
                pl.BlockSpec((1, tn), lambda j, i: (0, j)),
            ]
            out_specs = pl.BlockSpec((tm, tn), lambda j, i: (i, j))
        kernel = _linear_relu_single_k
        scratch_shapes = []
        dim_sem = ("parallel", "parallel")
        bytes_x = x_total * (1 if m_outer else nt)
        bytes_w = w_total * (mt if m_outer else 1)
    else:
        # K is the LAST grid axis and the output block index ignores it
        # (required for the in-place accumulation in the multi-K kernels).
        grid = (nt, mt, kt)
        if out_dtype == jnp.float32:
            kernel = _linear_relu_multi_k_f32out
            scratch_shapes = []
        else:
            kernel = _linear_relu_multi_k_scratch
            scratch_shapes = [pltpu.VMEM((tm, tn), jnp.float32)]
        in_specs = [
            pl.BlockSpec((tm, tk), lambda j, i, k: (i, k)),
            pl.BlockSpec((tn, tk), lambda j, i, k: (j, k)),
            pl.BlockSpec((1, tn), lambda j, i, k: (0, j)),
        ]
        out_specs = pl.BlockSpec((tm, tn), lambda j, i, k: (i, j))
        dim_sem = ("parallel", "parallel", "arbitrary")
        bytes_x = x_total * nt
        bytes_w = w_total * mt
        # TODO(synk): if this fallback ever dominates, consider
        # pipeline_mode=pl.Buffered(3) on the x/W specs to smooth DMA jitter.

    cost = pl.CostEstimate(
        flops=2 * m_pad * n_pad * k_pad,
        transcendentals=0,
        bytes_accessed=bytes_x + bytes_w + n_pad * 4 + m_pad * n_pad * out_bytes,
    )

    needed = (2 * tm * tk + 2 * tn * tk) * in_bytes + 2 * tn * 4 \
        + 2 * tm * tn * out_bytes \
        + (tm * tn * 4 if (multi_k and out_bytes != 4) else 0)
    vmem_limit = min(int(0.9 * vmem_cap), max(32 << 20, needed + (8 << 20)))

    out = pl.pallas_call(
        kernel,
        out_shape=jax.ShapeDtypeStruct((m_pad, n_pad), out_dtype),
        grid_spec=pltpu.PrefetchScalarGridSpec(
            num_scalar_prefetch=0,
            grid=grid,
            in_specs=in_specs,
            out_specs=out_specs,
            scratch_shapes=scratch_shapes,
        ),
        compiler_params=pltpu.CompilerParams(
            dimension_semantics=dim_sem,
            vmem_limit_bytes=vmem_limit,
        ),
        cost_estimate=cost,
    )(x, w, b)

    if m_pad != M or n_pad != out_dim:
        out = out[:M, :out_dim]
    return out.reshape(*lead, out_dim)


# ---------------------------------------------------------------------------
# Demo / correctness check
# ---------------------------------------------------------------------------
if __name__ == "__main__":
    # Small deterministic setup consistent with the module:
    #   in_dim = 32, out_dim = 64 (out_dim comes from the bias shape in __init__)
    batch, num_boxes, in_dim, out_dim = 2, 8, 32, 64

    key = jax.random.PRNGKey(0)
    k_img, k_w, k_b = jax.random.split(key, 3)

    image = jax.random.normal(k_img, (batch, num_boxes, in_dim), dtype=jnp.float32)
    # nn.Linear weight shape is (out_dim, in_dim); bias is (out_dim,)
    weight = jax.random.normal(k_w, (out_dim, in_dim), dtype=jnp.float32) * 0.05
    bias = jax.random.normal(k_b, (out_dim,), dtype=jnp.float32) * 0.05

    ref = jnp.maximum(jnp.einsum("bnd,od->bno", image, weight) + bias, 0.0)

    # 1) Default bf16-operand path with a pre-packed weight (hot-path config).
    w_packed = pack_fc7_weight(weight)                       # one-time packing
    out = jax.block_until_ready(finetune_fc7_forward(image, w_packed, bias))
    assert out.shape == (batch, num_boxes, out_dim) and out.dtype == image.dtype
    assert jnp.allclose(out, ref, atol=2e-2, rtol=2e-2)

    # 2) Exact f32 path (compute_dtype=None), raw PyTorch-layout weight.
    out_f32 = jax.block_until_ready(
        finetune_fc7_forward(image, weight, bias, compute_dtype=None))
    assert jnp.allclose(out_f32, ref, atol=1e-5, rtol=1e-5)

    # 3) K-streamed fallback path (forced via tk_cap), accumulate-into-output.
    in_dim2 = 384
    img2 = jax.random.normal(k_img, (batch, num_boxes, in_dim2), dtype=jnp.float32)
    w2 = jax.random.normal(k_w, (out_dim, in_dim2), dtype=jnp.float32) * 0.05
    out2 = jax.block_until_ready(
        finetune_fc7_forward(img2, w2, bias, compute_dtype=None, tk_cap=128))
    ref2 = jnp.maximum(jnp.einsum("bnd,od->bno", img2, w2) + bias, 0.0)
    assert jnp.allclose(out2, ref2, atol=1e-5, rtol=1e-5)

    # 4) K-streamed fallback with non-f32 output (exercises the scratch kernel).
    img2_bf16 = img2.astype(jnp.bfloat16)
    out3 = jax.block_until_ready(
        finetune_fc7_forward(img2_bf16, w2, bias, tk_cap=128))
    ref3 = jnp.maximum(
        jnp.einsum("bnd,od->bno", img2_bf16.astype(jnp.float32), w2) + bias, 0.0)
    assert out3.dtype == jnp.bfloat16
    assert jnp.allclose(out3.astype(jnp.float32), ref3, atol=5e-2, rtol=5e-2)

    print("KERNEL_OK")
</pallas_src>

<mosaic_0001>
module attributes {stable_mosaic.version = 11 : i64} {
  func.func @_linear_relu_single_k(%arg0: i32, %arg1: i32, %arg2: memref<16x128xbf16, #tpu.memory_space<vmem>>, %arg3: memref<128x128xbf16, #tpu.memory_space<vmem>>, %arg4: memref<1x128xf32, #tpu.memory_space<vmem>>, %arg5: memref<16x128xf32, #tpu.memory_space<vmem>>) attributes {dimension_semantics = [#tpu.dimension_semantics<parallel>, #tpu.dimension_semantics<parallel>], iteration_bounds = array<i64: 1, 1>, scalar_prefetch = 0 : i64, scratch_operands = 0 : i64, tpu.core_type = #tpu.core_type<tc>, window_params = [{transform_indices = @transform_0, window_bounds = array<i64: 16, 128>}, {transform_indices = @transform_1, window_bounds = array<i64: 128, 128>}, {transform_indices = @transform_2, window_bounds = array<i64: 1, 128>}, {transform_indices = @transform_3, window_bounds = array<i64: 16, 128>}]} {
    %c0 = arith.constant 0 : index
    %c0_0 = arith.constant 0 : index
    %0 = vector.load %arg2[%c0, %c0_0] : memref<16x128xbf16, #tpu.memory_space<vmem>>, vector<16x128xbf16>
    %c0_1 = arith.constant 0 : index
    %c0_2 = arith.constant 0 : index
    %1 = vector.load %arg3[%c0_1, %c0_2] : memref<128x128xbf16, #tpu.memory_space<vmem>>, vector<128x128xbf16>
    %cst = arith.constant dense<0.000000e+00> : vector<16x128xf32>
    %2 = tpu.matmul %0, %1, %cst {dimension_numbers = #tpu.dot_dimension_numbers<[1], [1], [0], [0], [0, 0, 1, 0], [], []>} : vector<16x128xbf16>, vector<128x128xbf16>, vector<16x128xf32> -> vector<16x128xf32>
    %c0_3 = arith.constant 0 : index
    %c0_4 = arith.constant 0 : index
    %3 = vector.load %arg4[%c0_3, %c0_4] : memref<1x128xf32, #tpu.memory_space<vmem>>, vector<1x128xf32>
    %4 = vector.broadcast %3 : vector<1x128xf32> to vector<16x128xf32>
    %5 = arith.addf %2, %4 : vector<16x128xf32>
    %cst_5 = arith.constant 0.000000e+00 : f32
    %6 = vector.broadcast %cst_5 : f32 to vector<16x128xf32>
    %7 = arith.maximumf %5, %6 : vector<16x128xf32>
    %c0_6 = arith.constant 0 : index
    %c0_7 = arith.constant 0 : index
    %8 = vector.load %arg5[%c0_6, %c0_7] : memref<16x128xf32, #tpu.memory_space<vmem>>, vector<16x128xf32>
    tpu.vector_store %arg5[%c0_6, %c0_7], %7 {strides = array<i32>} : memref<16x128xf32, #tpu.memory_space<vmem>>, vector<16x128xf32>,
    return
  }
  func.func @transform_0(%arg0: i32, %arg1: i32) -> (i32, i32) {
    %c0_i32 = arith.constant 0 : i32
    %c0_i32_0 = arith.constant 0 : i32
    return %arg0, %c0_i32 : i32, i32
  }
  func.func @transform_1(%arg0: i32, %arg1: i32) -> (i32, i32) {
    %c0_i32 = arith.constant 0 : i32
    %c0_i32_0 = arith.constant 0 : i32
    return %arg1, %c0_i32 : i32, i32
  }
  func.func @transform_2(%arg0: i32, %arg1: i32) -> (i32, i32) {
    %c0_i32 = arith.constant 0 : i32
    %c0_i32_0 = arith.constant 0 : i32
    return %c0_i32, %arg1 : i32, i32
  }
  func.func @transform_3(%arg0: i32, %arg1: i32) -> (i32, i32) {
    %c0_i32 = arith.constant 0 : i32
    return %arg0, %arg1 : i32, i32
  }
}

</mosaic_0001>

<llo_original>
// kernel: finetune_fc7_forward.1
$region0: #{finetune_fc7_forward.1}
  #allocation0 [shape = 'u32[]', space=smem, size = 0x4, offset = 0x4, fixed_abs, tag = 'smem constant byte address 0x4 - core index']
  #allocation1 [shape = 'u32[144,128]{1,0:T(1,128)}', space=vmem, size = 0x12000, scoped, tag = 'internal scratch']
  %s0 = inlined_call_operand.vmem [shape: bf16[16,128], index: 0, kind: input, shape index: {}]
  %s1 = inlined_call_operand.hbm [shape: bf16[128,128], index: 1, kind: input, shape index: {}]
  %s2 = inlined_call_operand.vmem [shape: f32[1,128], index: 2, kind: input, shape index: {}]
  %s3 = inlined_call_operand.vmem [shape: f32[16,128], index: 3, kind: output, shape index: {}]
  %s4 = sld [smem:[#allocation0]]
  $region26: #{finetune_fc7_forward.1} parent=0
    _
  %s6 = ssub.s32 1, %s4
  %s7 = scalar_select 0, %s6, %s4
  $region1: #{finetune_fc7_forward.1} parent=0
    #allocation2 [shape = 'u8[32768]{0}', space=vmem, size = 0x8000, scoped, tag = 'input window, operand 1, single buffered']
    #allocation3 [shape = 's32[1]{0}', space=sflag, size = 0x4, scoped, tag = 'scoped memory for finetune_fc7_forward.1']
    %8 = vsyncpa [#allocation3], 0
    // Predicated region
    $region2: #{finetune_fc7_forward.1} parent=1 // pred_check
      _
    $region3: #{finetune_fc7_forward.1} parent=1 // pred_check_branch
      %10 = sbr.rel (0) target = $region5
    $region4: #{finetune_fc7_forward.1} parent=1 // pred_region
      _
    $region5: #{finetune_fc7_forward.1} parent=1 // pred_fallthru
      _
    // Predicated region
    $region6: #{finetune_fc7_forward.1} parent=1 // pred_check
      _
    $region7: #{finetune_fc7_forward.1} parent=1 // pred_check_branch
      %12 = sbr.rel (0) target = $region9
    $region8: #{finetune_fc7_forward.1} parent=1 // pred_region
      %s14 = ssub.s32 1024, 1024
      %15 = vsyncadd [#allocation3], %s14
      %s16 = sshll.u32 [#allocation2], 4
      %s17 = int_to_ptr.vmem [resolvable:$true] %s16
      %22 = dma.hbm_to_vmem [thread:$0]  %s1, 1024, %s17, [#allocation3], 64, 64, 4
    $region9: #{finetune_fc7_forward.1} parent=1 // pred_fallthru
      _
    // Predicated region
    $region10: #{finetune_fc7_forward.1} parent=1 // pred_check
      _
    $region11: #{finetune_fc7_forward.1} parent=1 // pred_check_branch
      %24 = sbr.rel (0) target = $region13
    $region12: #{finetune_fc7_forward.1} parent=1 // pred_region
      _
    $region13: #{finetune_fc7_forward.1} parent=1 // pred_fallthru
      _
    // Predicated region
    $region14: #{finetune_fc7_forward.1} parent=1 // pred_check
      _
    $region15: #{finetune_fc7_forward.1} parent=1 // pred_check_branch
      %26 = sbr.rel (0) target = $region17
    $region16: #{finetune_fc7_forward.1} parent=1 // pred_region
      %27 = dma.done [#allocation3], 1024
    $region17: #{finetune_fc7_forward.1} parent=1 // pred_fallthru
      _
    %v29 = vld [vmem:[%s0] sm:$0xf]
    %v30 = vld [vmem:[%s0 + $0x4] sm:$0xf]
    %v31 = vld [vmem:[#allocation2] sm:$0xf]
    %v32 = vld [vmem:[#allocation2 + $0x4] sm:$0xf]
    %v33 = vld [vmem:[#allocation2 + $0x8] sm:$0xf]
    %v34 = vld [vmem:[#allocation2 + $0xc] sm:$0xf]
    %v35 = vld [vmem:[#allocation2 + $0x10] sm:$0xf]
    %v36 = vld [vmem:[#allocation2 + $0x14] sm:$0xf]
    %v37 = vld [vmem:[#allocation2 + $0x18] sm:$0xf]
    %v38 = vld [vmem:[#allocation2 + $0x1c] sm:$0xf]
    %v39 = vld [vmem:[#allocation2 + $0x20] sm:$0xf]
    %v40 = vld [vmem:[#allocation2 + $0x24] sm:$0xf]
    %v41 = vld [vmem:[#allocation2 + $0x28] sm:$0xf]
    %v42 = vld [vmem:[#allocation2 + $0x2c] sm:$0xf]
    %v43 = vld [vmem:[#allocation2 + $0x30] sm:$0xf]
    %v44 = vld [vmem:[#allocation2 + $0x34] sm:$0xf]
    %v45 = vld [vmem:[#allocation2 + $0x38] sm:$0xf]
    %v46 = vld [vmem:[#allocation2 + $0x3c] sm:$0xf]
    %v47 = vld [vmem:[%s2] sm:$0x1]
    %v49 = vlaneseq
    %v50 = vshrl.u32 %v49, 7
    %v51 = vsub.s32 0, %v50
    %v52 = vrot.slane %v47, %v51
    %v56 = vunpack.c.l.b16 %v29
    %v57 = vunpack.c.l.b16 %v30
    %v58 = vpack.c.b16 %v57, %v56
    %v76 = vunpack.c.l.b16 %v31
    %v77 = vunpack.c.l.b16 %v32
    %v78 = vunpack.c.l.b16 %v33
    %v79 = vunpack.c.l.b16 %v34
    %v80 = vunpack.c.l.b16 %v35
    %v81 = vunpack.c.l.b16 %v36
    %v82 = vunpack.c.l.b16 %v37
    %v83 = vunpack.c.l.b16 %v38
    %v84 = vunpack.c.l.b16 %v39
    %v85 = vunpack.c.l.b16 %v40
    %v86 = vunpack.c.l.b16 %v41
    %v87 = vunpack.c.l.b16 %v42
    %v88 = vunpack.c.l.b16 %v43
    %v89 = vunpack.c.l.b16 %v44
    %v90 = vunpack.c.l.b16 %v45
    %v91 = vunpack.c.l.b16 %v46
    %v92 = vpack.c.b16 %v77, %v76
    %v93 = vpack.c.b16 %v79, %v78
    %v94 = vpack.c.b16 %v81, %v80
    %v95 = vpack.c.b16 %v83, %v82
    %v96 = vpack.c.b16 %v85, %v84
    %v97 = vpack.c.b16 %v87, %v86
    %v98 = vpack.c.b16 %v89, %v88
    %v99 = vpack.c.b16 %v91, %v90
    %108 = vmatprep.subr.bf16.mxu0 0
    %109 = vmatpush1.bf16.xpose.msra.mxu0 %v92
    %110 = vmatprep.subr.bf16.mxu0 0
    %111 = vmatpush1.bf16.xpose.msra.mxu0 %v93
    %112 = vmatprep.subr.bf16.mxu0 0
    %113 = vmatpush1.bf16.xpose.msra.mxu0 %v94
    %114 = vmatprep.subr.bf16.mxu0 0
    %115 = vmatpush1.bf16.xpose.msra.mxu0 %v95
    %116 = vmatprep.subr.bf16.mxu0 0
    %117 = vmatpush1.bf16.xpose.msra.mxu0 %v96
    %118 = vmatprep.subr.bf16.mxu0 0
    %119 = vmatpush1.bf16.xpose.msra.mxu0 %v97
    %120 = vmatprep.subr.bf16.mxu0 0
    %121 = vmatpush1.bf16.xpose.msra.mxu0 %v98
    %122 = vmatprep.subr.bf16.mxu0 0
    %123 = vmatpush1.bf16.xpose.msra.mxu0 %v99
    %124 = vmatprep.subr.bf16.mxu0 0
    %125 = vmatpush1.bf16.xpose.msra.mxu0 0
    %126 = vmatprep.subr.bf16.mxu0 0
    %127 = vmatpush1.bf16.xpose.msra.mxu0 0
    %128 = vmatprep.subr.bf16.mxu0 0
    %129 = vmatpush1.bf16.xpose.msra.mxu0 0
    %130 = vmatprep.subr.bf16.mxu0 0
    %131 = vmatpush1.bf16.xpose.msra.mxu0 0
    %132 = vmatprep.subr.bf16.mxu0 0
    %133 = vmatpush1.bf16.xpose.msra.mxu0 0
    %134 = vmatprep.subr.bf16.mxu0 0
    %135 = vmatpush1.bf16.xpose.msra.mxu0 0
    %136 = vmatprep.subr.bf16.mxu0 0
    %137 = vmatpush1.bf16.xpose.msra.mxu0 0
    %138 = vmatprep.subr.bf16.mxu0 0
    %139 = vmatpush1.bf16.xpose.msra.mxu0 0
    %140 = vmatprep.mubr.bf16.mxu0 0
    %141 = vmatmul.mubr.bf16.gmra.mrb[0].mxu0 %v58
    %v142 = vpop.f32.mrb[0].mxu0
    %v143 = vadd.f32 %v52, %v142
    %v144 = vpop.f32.mrb[0].mxu0
    %v145 = vpop.f32.mrb[0].mxu0
    %v146 = vadd.f32 %v52, %v145
    %v147 = vpop.f32.mrb[0].mxu0
    %148 = vdwg.mxu0
    %v149 = vmax.f32 %v143, 0.0
    %v150 = vmax.f32 %v146, 0.0
    %151 = vst [vmem:[%s3] sm:$0xff] %v149
    %152 = vst [vmem:[%s3 + $0x8] sm:$0xff] %v150
    // Predicated region
    $region18: #{finetune_fc7_forward.1} parent=1 // pred_check
      _
    $region19: #{finetune_fc7_forward.1} parent=1 // pred_check_branch
      %154 = sbr.rel (0) target = $region21
    $region20: #{finetune_fc7_forward.1} parent=1 // pred_region
      _
    $region21: #{finetune_fc7_forward.1} parent=1 // pred_fallthru
      _
    // Predicated region
    $region22: #{finetune_fc7_forward.1} parent=1 // pred_check
      _
    $region23: #{finetune_fc7_forward.1} parent=1 // pred_check_branch
      %156 = sbr.rel (0) target = $region25
    $region24: #{finetune_fc7_forward.1} parent=1 // pred_region
      _
    $region25: #{finetune_fc7_forward.1} parent=1 // pred_fallthru
      _
    %157 = vsyncpa [#allocation3], 1

</llo_original>
